<compile_context>
chip_gen: v7x
topology: tpu7x:2x2x1
jax: 0.10.0
libtpu: 0.0.40
codegen_flags: <defaults>
</compile_context>

<pallas_src>
import numpy as np
import jax
import jax.numpy as jnp
from jax import lax
from jax.experimental import pallas as pl
from jax.experimental.pallas import tpu as pltpu


def _lstm_fc_kernel(x_ref, wih_ref, whh_ref, b_ref, wfc_ref, bfc_ref, out_ref, gx_ref):
    """Whole-sequence LSTM + final Linear in one kernel invocation.

    x_ref   : (T, I)   full input sequence (VMEM)
    wih_ref : (I, 4H)  input->gates weights (pre-transposed)
    whh_ref : (H, 4H)  hidden->gates weights (pre-transposed)
    b_ref   : (1, 4H)  combined bias (b_ih + b_hh), PyTorch gate order (i, f, g, o)
    wfc_ref : (H, O)   final linear weights (pre-transposed)
    bfc_ref : (1, O)   final linear bias
    out_ref : (1, O)   fc(h_T)  == PyTorch output[-1]
    gx_ref  : (T, 4H)  VMEM scratch holding the hoisted input projection
    """
    T = x_ref.shape[0]
    H = whh_ref.shape[0]

    # Hoisted input projection: one MXU matmul over every timestep (+ combined bias),
    # parked in VMEM scratch so the loop reads one (1, 4H) row per step.
    gx_ref[...] = (jnp.dot(x_ref[...], wih_ref[...],
                           preferred_element_type=jnp.float32)
                   + b_ref[...])                                  # (T, 4H)

    whh = whh_ref[...]                                            # resident across the loop

    def step(t, carry):
        h, c = carry
        gates = gx_ref[pl.ds(t, 1), :] + jnp.dot(
            h, whh, preferred_element_type=jnp.float32)           # (1, 4H)
        sg = jax.nn.sigmoid(gates)   # one EUP pass over the whole 4H row
        th = jnp.tanh(gates)         # one EUP pass over the whole 4H row
        i_g = sg[:, 0 * H:1 * H]
        f_g = sg[:, 1 * H:2 * H]
        g_g = th[:, 2 * H:3 * H]
        o_g = sg[:, 3 * H:4 * H]
        c_new = f_g * c + i_g * g_g
        h_new = o_g * jnp.tanh(c_new)
        return (h_new, c_new)

    h0 = jnp.zeros((1, H), jnp.float32)
    c0 = jnp.zeros((1, H), jnp.float32)
    # Short, fixed trip count: fully unrolled for scheduler visibility; h/c stay in vregs.
    h, _ = lax.fori_loop(0, T, step, (h0, c0), unroll=True)

    # Final Linear on the last hidden state -- straight-line, runs exactly once.
    out = jnp.dot(h, wfc_ref[...], preferred_element_type=jnp.float32) + bfc_ref[...]
    out_ref[...] = out.astype(out_ref.dtype)


def lstm_model_forward(x, w_ih, w_hh, b_ih, b_hh, w_fc, b_fc):
    """x: (T, input_size) float32. Returns (output_size,) == PyTorch LSTMModel()(x)."""
    T, I = x.shape
    fourH = w_ih.shape[0]
    H = fourH // 4
    O = w_fc.shape[0]

    x32 = x.astype(jnp.float32)
    wih_t = jnp.asarray(w_ih, jnp.float32).T                      # (I, 4H)
    whh_t = jnp.asarray(w_hh, jnp.float32).T                      # (H, 4H)
    b = jnp.asarray(b_ih + b_hh, jnp.float32).reshape(1, fourH)   # (1, 4H)
    wfc_t = jnp.asarray(w_fc, jnp.float32).T                      # (H, O)
    bfc = jnp.asarray(b_fc, jnp.float32).reshape(1, O)            # (1, O)

    out = pl.pallas_call(
        _lstm_fc_kernel,
        out_shape=jax.ShapeDtypeStruct((1, O), jnp.float32),
        # Gridless call: every operand is a single full block resident in VMEM
        # (~20 KB total at these shapes -- trivially within VMEM on v5e/v6e/v7x).
        in_specs=[pl.BlockSpec(memory_space=pltpu.MemorySpace.VMEM) for _ in range(6)],
        out_specs=pl.BlockSpec(memory_space=pltpu.MemorySpace.VMEM),
        scratch_shapes=[pltpu.VMEM((T, fourH), jnp.float32)],
    )(x32, wih_t, whh_t, b, wfc_t, bfc)
    return out[0]


def lstm_model_reference(x, w_ih, w_hh, b_ih, b_hh, w_fc, b_fc):
    """Pure-JAX reference mirroring torch.nn.LSTM + nn.Linear, returns last row."""
    H = w_hh.shape[1]

    def step(carry, x_t):
        h, c = carry
        gates = x_t @ w_ih.T + b_ih + h @ w_hh.T + b_hh
        i_g = jax.nn.sigmoid(gates[0 * H:1 * H])
        f_g = jax.nn.sigmoid(gates[1 * H:2 * H])
        g_g = jnp.tanh(gates[2 * H:3 * H])
        o_g = jax.nn.sigmoid(gates[3 * H:4 * H])
        c_new = f_g * c + i_g * g_g
        h_new = o_g * jnp.tanh(c_new)
        return (h_new, c_new), h_new

    init = (jnp.zeros((H,), jnp.float32), jnp.zeros((H,), jnp.float32))
    (_, _), hs = lax.scan(step, init, x)
    return hs[-1] @ w_fc.T + b_fc


if __name__ == "__main__":
    # Small shapes consistent with the module's forward.
    T, INPUT_SIZE, HIDDEN_SIZE, OUTPUT_SIZE = 8, 16, 32, 8

    key = jax.random.PRNGKey(0)
    ks = jax.random.split(key, 8)
    bound = 1.0 / np.sqrt(HIDDEN_SIZE)   # PyTorch default uniform init range

    x = jax.random.normal(ks[0], (T, INPUT_SIZE), jnp.float32)
    w_ih = jax.random.uniform(ks[1], (4 * HIDDEN_SIZE, INPUT_SIZE), jnp.float32, -bound, bound)
    w_hh = jax.random.uniform(ks[2], (4 * HIDDEN_SIZE, HIDDEN_SIZE), jnp.float32, -bound, bound)
    b_ih = jax.random.uniform(ks[3], (4 * HIDDEN_SIZE,), jnp.float32, -bound, bound)
    b_hh = jax.random.uniform(ks[4], (4 * HIDDEN_SIZE,), jnp.float32, -bound, bound)
    w_fc = jax.random.uniform(ks[5], (OUTPUT_SIZE, HIDDEN_SIZE), jnp.float32, -bound, bound)
    b_fc = jax.random.uniform(ks[6], (OUTPUT_SIZE,), jnp.float32, -bound, bound)

    out = lstm_model_forward(x, w_ih, w_hh, b_ih, b_hh, w_fc, b_fc)
    out = jax.block_until_ready(out)

    ref = jax.block_until_ready(
        lstm_model_reference(x, w_ih, w_hh, b_ih, b_hh, w_fc, b_fc))
    np.testing.assert_allclose(np.asarray(out), np.asarray(ref), rtol=1e-4, atol=1e-5)

    print("KERNEL_OK")
</pallas_src>

<mosaic_0001>
module attributes {stable_mosaic.version = 11 : i64} {
  func.func @_lstm_fc_kernel(%arg0: memref<8x16xf32, #tpu.memory_space<vmem>>, %arg1: memref<16x128xf32, #tpu.memory_space<vmem>>, %arg2: memref<32x128xf32, #tpu.memory_space<vmem>>, %arg3: memref<1x128xf32, #tpu.memory_space<vmem>>, %arg4: memref<32x8xf32, #tpu.memory_space<vmem>>, %arg5: memref<1x8xf32, #tpu.memory_space<vmem>>, %arg6: memref<1x8xf32, #tpu.memory_space<vmem>>, %arg7: memref<8x128xf32, #tpu.memory_space<vmem>>) attributes {dimension_semantics = [], scalar_prefetch = 0 : i64, scratch_operands = 1 : i64, tpu.core_type = #tpu.core_type<tc>} {
    %c0 = arith.constant 0 : index
    %c0_0 = arith.constant 0 : index
    %0 = vector.load %arg0[%c0, %c0_0] : memref<8x16xf32, #tpu.memory_space<vmem>>, vector<8x16xf32>
    %c0_1 = arith.constant 0 : index
    %c0_2 = arith.constant 0 : index
    %1 = vector.load %arg1[%c0_1, %c0_2] : memref<16x128xf32, #tpu.memory_space<vmem>>, vector<16x128xf32>
    %cst = arith.constant dense<0.000000e+00> : vector<8x128xf32>
    %2 = tpu.matmul %0, %1, %cst {dimension_numbers = #tpu.dot_dimension_numbers<[1], [0], [0], [1], [0, 0, 1, 1], [], []>} : vector<8x16xf32>, vector<16x128xf32>, vector<8x128xf32> -> vector<8x128xf32>
    %c0_3 = arith.constant 0 : index
    %c0_4 = arith.constant 0 : index
    %3 = vector.load %arg3[%c0_3, %c0_4] : memref<1x128xf32, #tpu.memory_space<vmem>>, vector<1x128xf32>
    %4 = vector.broadcast %3 : vector<1x128xf32> to vector<8x128xf32>
    %5 = arith.addf %2, %4 : vector<8x128xf32>
    %c0_5 = arith.constant 0 : index
    %c0_6 = arith.constant 0 : index
    %6 = vector.load %arg7[%c0_5, %c0_6] : memref<8x128xf32, #tpu.memory_space<vmem>>, vector<8x128xf32>
    tpu.vector_store %arg7[%c0_5, %c0_6], %5 {strides = array<i32>} : memref<8x128xf32, #tpu.memory_space<vmem>>, vector<8x128xf32>,
    %c0_7 = arith.constant 0 : index
    %c0_8 = arith.constant 0 : index
    %7 = vector.load %arg2[%c0_7, %c0_8] : memref<32x128xf32, #tpu.memory_space<vmem>>, vector<32x128xf32>
    %cst_9 = arith.constant 0.000000e+00 : f32
    %8 = vector.broadcast %cst_9 : f32 to vector<1x32xf32>
    %cst_10 = arith.constant 0.000000e+00 : f32
    %9 = vector.broadcast %cst_10 : f32 to vector<1x32xf32>
    %c0_i32 = arith.constant 0 : i32
    %10 = arith.index_cast %c0_i32 : i32 to index
    %c0_11 = arith.constant 0 : index
    %11 = vector.load %arg7[%10, %c0_11] : memref<8x128xf32, #tpu.memory_space<vmem>>, vector<1x128xf32>
    %cst_12 = arith.constant dense<0.000000e+00> : vector<1x128xf32>
    %12 = tpu.matmul %8, %7, %cst_12 {dimension_numbers = #tpu.dot_dimension_numbers<[1], [0], [0], [1], [0, 0, 1, 1], [], []>} : vector<1x32xf32>, vector<32x128xf32>, vector<1x128xf32> -> vector<1x128xf32>
    %13 = arith.addf %11, %12 : vector<1x128xf32>
    %14 = arith.negf %13 : vector<1x128xf32>
    %15 = math.exp %14 : vector<1x128xf32>
    %cst_13 = arith.constant 1.000000e+00 : f32
    %16 = vector.broadcast %cst_13 : f32 to vector<1x128xf32>
    %17 = arith.addf %16, %15 : vector<1x128xf32>
    %18 = arith.divf %16, %17 : vector<1x128xf32>
    %19 = math.tanh %13 : vector<1x128xf32>
    %20 = vector.extract_strided_slice %18 {offsets = [0, 0], sizes = [1, 32], strides = [1, 1]} : vector<1x128xf32> to vector<1x32xf32>
    %21 = vector.extract_strided_slice %18 {offsets = [0, 32], sizes = [1, 32], strides = [1, 1]} : vector<1x128xf32> to vector<1x32xf32>
    %22 = vector.extract_strided_slice %19 {offsets = [0, 64], sizes = [1, 32], strides = [1, 1]} : vector<1x128xf32> to vector<1x32xf32>
    %23 = vector.extract_strided_slice %18 {offsets = [0, 96], sizes = [1, 32], strides = [1, 1]} : vector<1x128xf32> to vector<1x32xf32>
    %24 = arith.mulf %21, %9 : vector<1x32xf32>
    %25 = arith.mulf %20, %22 : vector<1x32xf32>
    %26 = arith.addf %24, %25 : vector<1x32xf32>
    %27 = math.tanh %26 : vector<1x32xf32>
    %28 = arith.mulf %23, %27 : vector<1x32xf32>
    %c1_i32 = arith.constant 1 : i32
    %29 = arith.index_cast %c1_i32 : i32 to index
    %c0_14 = arith.constant 0 : index
    %30 = vector.load %arg7[%29, %c0_14] : memref<8x128xf32, #tpu.memory_space<vmem>>, vector<1x128xf32>
    %cst_15 = arith.constant dense<0.000000e+00> : vector<1x128xf32>
    %31 = tpu.matmul %28, %7, %cst_15 {dimension_numbers = #tpu.dot_dimension_numbers<[1], [0], [0], [1], [0, 0, 1, 1], [], []>} : vector<1x32xf32>, vector<32x128xf32>, vector<1x128xf32> -> vector<1x128xf32>
    %32 = arith.addf %30, %31 : vector<1x128xf32>
    %33 = arith.negf %32 : vector<1x128xf32>
    %34 = math.exp %33 : vector<1x128xf32>
    %cst_16 = arith.constant 1.000000e+00 : f32
    %35 = vector.broadcast %cst_16 : f32 to vector<1x128xf32>
    %36 = arith.addf %35, %34 : vector<1x128xf32>
    %37 = arith.divf %35, %36 : vector<1x128xf32>
    %38 = math.tanh %32 : vector<1x128xf32>
    %39 = vector.extract_strided_slice %37 {offsets = [0, 0], sizes = [1, 32], strides = [1, 1]} : vector<1x128xf32> to vector<1x32xf32>
    %40 = vector.extract_strided_slice %37 {offsets = [0, 32], sizes = [1, 32], strides = [1, 1]} : vector<1x128xf32> to vector<1x32xf32>
    %41 = vector.extract_strided_slice %38 {offsets = [0, 64], sizes = [1, 32], strides = [1, 1]} : vector<1x128xf32> to vector<1x32xf32>
    %42 = vector.extract_strided_slice %37 {offsets = [0, 96], sizes = [1, 32], strides = [1, 1]} : vector<1x128xf32> to vector<1x32xf32>
    %43 = arith.mulf %40, %26 : vector<1x32xf32>
    %44 = arith.mulf %39, %41 : vector<1x32xf32>
    %45 = arith.addf %43, %44 : vector<1x32xf32>
    %46 = math.tanh %45 : vector<1x32xf32>
    %47 = arith.mulf %42, %46 : vector<1x32xf32>
    %c2_i32 = arith.constant 2 : i32
    %48 = arith.index_cast %c2_i32 : i32 to index
    %c0_17 = arith.constant 0 : index
    %49 = vector.load %arg7[%48, %c0_17] : memref<8x128xf32, #tpu.memory_space<vmem>>, vector<1x128xf32>
    %cst_18 = arith.constant dense<0.000000e+00> : vector<1x128xf32>
    %50 = tpu.matmul %47, %7, %cst_18 {dimension_numbers = #tpu.dot_dimension_numbers<[1], [0], [0], [1], [0, 0, 1, 1], [], []>} : vector<1x32xf32>, vector<32x128xf32>, vector<1x128xf32> -> vector<1x128xf32>
    %51 = arith.addf %49, %50 : vector<1x128xf32>
    %52 = arith.negf %51 : vector<1x128xf32>
    %53 = math.exp %52 : vector<1x128xf32>
    %cst_19 = arith.constant 1.000000e+00 : f32
    %54 = vector.broadcast %cst_19 : f32 to vector<1x128xf32>
    %55 = arith.addf %54, %53 : vector<1x128xf32>
    %56 = arith.divf %54, %55 : vector<1x128xf32>
    %57 = math.tanh %51 : vector<1x128xf32>
    %58 = vector.extract_strided_slice %56 {offsets = [0, 0], sizes = [1, 32], strides = [1, 1]} : vector<1x128xf32> to vector<1x32xf32>
    %59 = vector.extract_strided_slice %56 {offsets = [0, 32], sizes = [1, 32], strides = [1, 1]} : vector<1x128xf32> to vector<1x32xf32>
    %60 = vector.extract_strided_slice %57 {offsets = [0, 64], sizes = [1, 32], strides = [1, 1]} : vector<1x128xf32> to vector<1x32xf32>
    %61 = vector.extract_strided_slice %56 {offsets = [0, 96], sizes = [1, 32], strides = [1, 1]} : vector<1x128xf32> to vector<1x32xf32>
    %62 = arith.mulf %59, %45 : vector<1x32xf32>
    %63 = arith.mulf %58, %60 : vector<1x32xf32>
    %64 = arith.addf %62, %63 : vector<1x32xf32>
    %65 = math.tanh %64 : vector<1x32xf32>
    %66 = arith.mulf %61, %65 : vector<1x32xf32>
    %c3_i32 = arith.constant 3 : i32
    %67 = arith.index_cast %c3_i32 : i32 to index
    %c0_20 = arith.constant 0 : index
    %68 = vector.load %arg7[%67, %c0_20] : memref<8x128xf32, #tpu.memory_space<vmem>>, vector<1x128xf32>
    %cst_21 = arith.constant dense<0.000000e+00> : vector<1x128xf32>
    %69 = tpu.matmul %66, %7, %cst_21 {dimension_numbers = #tpu.dot_dimension_numbers<[1], [0], [0], [1], [0, 0, 1, 1], [], []>} : vector<1x32xf32>, vector<32x128xf32>, vector<1x128xf32> -> vector<1x128xf32>
    %70 = arith.addf %68, %69 : vector<1x128xf32>
    %71 = arith.negf %70 : vector<1x128xf32>
    %72 = math.exp %71 : vector<1x128xf32>
    %cst_22 = arith.constant 1.000000e+00 : f32
    %73 = vector.broadcast %cst_22 : f32 to vector<1x128xf32>
    %74 = arith.addf %73, %72 : vector<1x128xf32>
    %75 = arith.divf %73, %74 : vector<1x128xf32>
    %76 = math.tanh %70 : vector<1x128xf32>
    %77 = vector.extract_strided_slice %75 {offsets = [0, 0], sizes = [1, 32], strides = [1, 1]} : vector<1x128xf32> to vector<1x32xf32>
    %78 = vector.extract_strided_slice %75 {offsets = [0, 32], sizes = [1, 32], strides = [1, 1]} : vector<1x128xf32> to vector<1x32xf32>
    %79 = vector.extract_strided_slice %76 {offsets = [0, 64], sizes = [1, 32], strides = [1, 1]} : vector<1x128xf32> to vector<1x32xf32>
    %80 = vector.extract_strided_slice %75 {offsets = [0, 96], sizes = [1, 32], strides = [1, 1]} : vector<1x128xf32> to vector<1x32xf32>
    %81 = arith.mulf %78, %64 : vector<1x32xf32>
    %82 = arith.mulf %77, %79 : vector<1x32xf32>
    %83 = arith.addf %81, %82 : vector<1x32xf32>
    %84 = math.tanh %83 : vector<1x32xf32>
    %85 = arith.mulf %80, %84 : vector<1x32xf32>
    %c4_i32 = arith.constant 4 : i32
    %86 = arith.index_cast %c4_i32 : i32 to index
    %c0_23 = arith.constant 0 : index
    %87 = vector.load %arg7[%86, %c0_23] : memref<8x128xf32, #tpu.memory_space<vmem>>, vector<1x128xf32>
    %cst_24 = arith.constant dense<0.000000e+00> : vector<1x128xf32>
    %88 = tpu.matmul %85, %7, %cst_24 {dimension_numbers = #tpu.dot_dimension_numbers<[1], [0], [0], [1], [0, 0, 1, 1], [], []>} : vector<1x32xf32>, vector<32x128xf32>, vector<1x128xf32> -> vector<1x128xf32>
    %89 = arith.addf %87, %88 : vector<1x128xf32>
    %90 = arith.negf %89 : vector<1x128xf32>
    %91 = math.exp %90 : vector<1x128xf32>
    %cst_25 = arith.constant 1.000000e+00 : f32
    %92 = vector.broadcast %cst_25 : f32 to vector<1x128xf32>
    %93 = arith.addf %92, %91 : vector<1x128xf32>
    %94 = arith.divf %92, %93 : vector<1x128xf32>
    %95 = math.tanh %89 : vector<1x128xf32>
    %96 = vector.extract_strided_slice %94 {offsets = [0, 0], sizes = [1, 32], strides = [1, 1]} : vector<1x128xf32> to vector<1x32xf32>
    %97 = vector.extract_strided_slice %94 {offsets = [0, 32], sizes = [1, 32], strides = [1, 1]} : vector<1x128xf32> to vector<1x32xf32>
    %98 = vector.extract_strided_slice %95 {offsets = [0, 64], sizes = [1, 32], strides = [1, 1]} : vector<1x128xf32> to vector<1x32xf32>
    %99 = vector.extract_strided_slice %94 {offsets = [0, 96], sizes = [1, 32], strides = [1, 1]} : vector<1x128xf32> to vector<1x32xf32>
    %100 = arith.mulf %97, %83 : vector<1x32xf32>
    %101 = arith.mulf %96, %98 : vector<1x32xf32>
    %102 = arith.addf %100, %101 : vector<1x32xf32>
    %103 = math.tanh %102 : vector<1x32xf32>
    %104 = arith.mulf %99, %103 : vector<1x32xf32>
    %c5_i32 = arith.constant 5 : i32
    %105 = arith.index_cast %c5_i32 : i32 to index
    %c0_26 = arith.constant 0 : index
    %106 = vector.load %arg7[%105, %c0_26] : memref<8x128xf32, #tpu.memory_space<vmem>>, vector<1x128xf32>
    %cst_27 = arith.constant dense<0.000000e+00> : vector<1x128xf32>
    %107 = tpu.matmul %104, %7, %cst_27 {dimension_numbers = #tpu.dot_dimension_numbers<[1], [0], [0], [1], [0, 0, 1, 1], [], []>} : vector<1x32xf32>, vector<32x128xf32>, vector<1x128xf32> -> vector<1x128xf32>
    %108 = arith.addf %106, %107 : vector<1x128xf32>
    %109 = arith.negf %108 : vector<1x128xf32>
    %110 = math.exp %109 : vector<1x128xf32>
    %cst_28 = arith.constant 1.000000e+00 : f32
    %111 = vector.broadcast %cst_28 : f32 to vector<1x128xf32>
    %112 = arith.addf %111, %110 : vector<1x128xf32>
    %113 = arith.divf %111, %112 : vector<1x128xf32>
    %114 = math.tanh %108 : vector<1x128xf32>
    %115 = vector.extract_strided_slice %113 {offsets = [0, 0], sizes = [1, 32], strides = [1, 1]} : vector<1x128xf32> to vector<1x32xf32>
    %116 = vector.extract_strided_slice %113 {offsets = [0, 32], sizes = [1, 32], strides = [1, 1]} : vector<1x128xf32> to vector<1x32xf32>
    %117 = vector.extract_strided_slice %114 {offsets = [0, 64], sizes = [1, 32], strides = [1, 1]} : vector<1x128xf32> to vector<1x32xf32>
    %118 = vector.extract_strided_slice %113 {offsets = [0, 96], sizes = [1, 32], strides = [1, 1]} : vector<1x128xf32> to vector<1x32xf32>
    %119 = arith.mulf %116, %102 : vector<1x32xf32>
    %120 = arith.mulf %115, %117 : vector<1x32xf32>
    %121 = arith.addf %119, %120 : vector<1x32xf32>
    %122 = math.tanh %121 : vector<1x32xf32>
    %123 = arith.mulf %118, %122 : vector<1x32xf32>
    %c6_i32 = arith.constant 6 : i32
    %124 = arith.index_cast %c6_i32 : i32 to index
    %c0_29 = arith.constant 0 : index
    %125 = vector.load %arg7[%124, %c0_29] : memref<8x128xf32, #tpu.memory_space<vmem>>, vector<1x128xf32>
    %cst_30 = arith.constant dense<0.000000e+00> : vector<1x128xf32>
    %126 = tpu.matmul %123, %7, %cst_30 {dimension_numbers = #tpu.dot_dimension_numbers<[1], [0], [0], [1], [0, 0, 1, 1], [], []>} : vector<1x32xf32>, vector<32x128xf32>, vector<1x128xf32> -> vector<1x128xf32>
    %127 = arith.addf %125, %126 : vector<1x128xf32>
    %128 = arith.negf %127 : vector<1x128xf32>
    %129 = math.exp %128 : vector<1x128xf32>
    %cst_31 = arith.constant 1.000000e+00 : f32
    %130 = vector.broadcast %cst_31 : f32 to vector<1x128xf32>
    %131 = arith.addf %130, %129 : vector<1x128xf32>
    %132 = arith.divf %130, %131 : vector<1x128xf32>
    %133 = math.tanh %127 : vector<1x128xf32>
    %134 = vector.extract_strided_slice %132 {offsets = [0, 0], sizes = [1, 32], strides = [1, 1]} : vector<1x128xf32> to vector<1x32xf32>
    %135 = vector.extract_strided_slice %132 {offsets = [0, 32], sizes = [1, 32], strides = [1, 1]} : vector<1x128xf32> to vector<1x32xf32>
    %136 = vector.extract_strided_slice %133 {offsets = [0, 64], sizes = [1, 32], strides = [1, 1]} : vector<1x128xf32> to vector<1x32xf32>
    %137 = vector.extract_strided_slice %132 {offsets = [0, 96], sizes = [1, 32], strides = [1, 1]} : vector<1x128xf32> to vector<1x32xf32>
    %138 = arith.mulf %135, %121 : vector<1x32xf32>
    %139 = arith.mulf %134, %136 : vector<1x32xf32>
    %140 = arith.addf %138, %139 : vector<1x32xf32>
    %141 = math.tanh %140 : vector<1x32xf32>
    %142 = arith.mulf %137, %141 : vector<1x32xf32>
    %c7_i32 = arith.constant 7 : i32
    %143 = arith.index_cast %c7_i32 : i32 to index
    %c0_32 = arith.constant 0 : index
    %144 = vector.load %arg7[%143, %c0_32] : memref<8x128xf32, #tpu.memory_space<vmem>>, vector<1x128xf32>
    %cst_33 = arith.constant dense<0.000000e+00> : vector<1x128xf32>
    %145 = tpu.matmul %142, %7, %cst_33 {dimension_numbers = #tpu.dot_dimension_numbers<[1], [0], [0], [1], [0, 0, 1, 1], [], []>} : vector<1x32xf32>, vector<32x128xf32>, vector<1x128xf32> -> vector<1x128xf32>
    %146 = arith.addf %144, %145 : vector<1x128xf32>
    %147 = arith.negf %146 : vector<1x128xf32>
    %148 = math.exp %147 : vector<1x128xf32>
    %cst_34 = arith.constant 1.000000e+00 : f32
    %149 = vector.broadcast %cst_34 : f32 to vector<1x128xf32>
    %150 = arith.addf %149, %148 : vector<1x128xf32>
    %151 = arith.divf %149, %150 : vector<1x128xf32>
    %152 = math.tanh %146 : vector<1x128xf32>
    %153 = vector.extract_strided_slice %151 {offsets = [0, 0], sizes = [1, 32], strides = [1, 1]} : vector<1x128xf32> to vector<1x32xf32>
    %154 = vector.extract_strided_slice %151 {offsets = [0, 32], sizes = [1, 32], strides = [1, 1]} : vector<1x128xf32> to vector<1x32xf32>
    %155 = vector.extract_strided_slice %152 {offsets = [0, 64], sizes = [1, 32], strides = [1, 1]} : vector<1x128xf32> to vector<1x32xf32>
    %156 = vector.extract_strided_slice %151 {offsets = [0, 96], sizes = [1, 32], strides = [1, 1]} : vector<1x128xf32> to vector<1x32xf32>
    %157 = arith.mulf %154, %140 : vector<1x32xf32>
    %158 = arith.mulf %153, %155 : vector<1x32xf32>
    %159 = arith.addf %157, %158 : vector<1x32xf32>
    %160 = math.tanh %159 : vector<1x32xf32>
    %161 = arith.mulf %156, %160 : vector<1x32xf32>
    %c8_i32 = arith.constant 8 : i32
    %c0_35 = arith.constant 0 : index
    %c0_36 = arith.constant 0 : index
    %162 = vector.load %arg4[%c0_35, %c0_36] : memref<32x8xf32, #tpu.memory_space<vmem>>, vector<32x8xf32>
    %cst_37 = arith.constant dense<0.000000e+00> : vector<1x8xf32>
    %163 = tpu.matmul %161, %162, %cst_37 {dimension_numbers = #tpu.dot_dimension_numbers<[1], [0], [0], [1], [0, 0, 1, 1], [], []>} : vector<1x32xf32>, vector<32x8xf32>, vector<1x8xf32> -> vector<1x8xf32>
    %c0_38 = arith.constant 0 : index
    %c0_39 = arith.constant 0 : index
    %164 = vector.load %arg5[%c0_38, %c0_39] : memref<1x8xf32, #tpu.memory_space<vmem>>, vector<1x8xf32>
    %165 = arith.addf %163, %164 : vector<1x8xf32>
    %c0_40 = arith.constant 0 : index
    %c0_41 = arith.constant 0 : index
    %166 = vector.load %arg6[%c0_40, %c0_41] : memref<1x8xf32, #tpu.memory_space<vmem>>, vector<1x8xf32>
    tpu.vector_store %arg6[%c0_40, %c0_41], %165 {strides = array<i32>} : memref<1x8xf32, #tpu.memory_space<vmem>>, vector<1x8xf32>,
    return
  }
}

</mosaic_0001>

<llo_original>
// kernel: tpu_custom_call.1
$region0: #{tpu_custom_call.1}
  #allocation0 [shape = 'u32[]', space=smem, size = 0x4, offset = 0x4, fixed_abs, tag = 'smem constant byte address 0x4 - core index']
  #allocation1 [shape = 'u32[144,128]{1,0:T(1,128)}', space=vmem, size = 0x12000, scoped, tag = 'internal scratch']
  #allocation2 [shape = 'f32[8,128]{1,0:T(8,128)}', space=vmem, size = 0x1000, scoped, tag = 'scratch operand']
  %s0 = inlined_call_operand.vmem [shape: f32[8,16], index: 0, kind: input, shape index: {}]
  %s1 = inlined_call_operand.hbm [shape: f32[16,128], index: 1, kind: input, shape index: {}]
  %s2 = inlined_call_operand.vmem [shape: f32[32,128], index: 2, kind: input, shape index: {}]
  %s3 = inlined_call_operand.vmem [shape: f32[1,128], index: 3, kind: input, shape index: {}]
  %s4 = inlined_call_operand.vmem [shape: f32[32,8], index: 4, kind: input, shape index: {}]
  %s5 = inlined_call_operand.vmem [shape: f32[1,8], index: 5, kind: input, shape index: {}]
  %s6 = inlined_call_operand.hbm [shape: f32[1,8], index: 6, kind: output, shape index: {}]
  %s7 = sld [smem:[#allocation0]]
  $region38: #{tpu_custom_call.1} parent=0
    _
  %s9 = ssub.s32 1, %s7
  %s10 = scalar_select 0, %s9, %s7
  $region1: #{tpu_custom_call.1} parent=0
    #allocation3 [shape = 'u8[8192]{0}', space=vmem, size = 0x2000, scoped, tag = 'input window, operand 1, single buffered']
    #allocation4 [shape = 's32[1]{0}', space=sflag, size = 0x4, scoped, tag = 'scoped memory for tpu_custom_call.1']
    #allocation5 [shape = 's32[1]{0}', space=sflag, size = 0x4, scoped, tag = 'scoped memory for tpu_custom_call.1']
    #allocation6 [shape = 'u8[512]{0}', space=vmem, size = 0x400, scoped, tag = 'output window, operand 0, single buffered']
    %11 = vsyncpa [#allocation4], 0
    %12 = vsyncpa [#allocation5], 0
    // Predicated region
    $region2: #{tpu_custom_call.1} parent=1 // pred_check
      _
    $region3: #{tpu_custom_call.1} parent=1 // pred_check_branch
      %14 = sbr.rel (0) target = $region5
    $region4: #{tpu_custom_call.1} parent=1 // pred_region
      _
    $region5: #{tpu_custom_call.1} parent=1 // pred_fallthru
      _
    // Predicated region
    $region6: #{tpu_custom_call.1} parent=1 // pred_check
      _
    $region7: #{tpu_custom_call.1} parent=1 // pred_check_branch
      %16 = sbr.rel (0) target = $region9
    $region8: #{tpu_custom_call.1} parent=1 // pred_region
      %s18 = ssub.s32 256, 256
      %19 = vsyncadd [#allocation4], %s18
      %s20 = sshll.u32 [#allocation3], 4
      %s21 = int_to_ptr.vmem [resolvable:$true] %s20
      %26 = dma.hbm_to_vmem [thread:$0]  %s1, 256, %s21, [#allocation4], 128, 128, 8
    $region9: #{tpu_custom_call.1} parent=1 // pred_fallthru
      _
    // Predicated region
    $region10: #{tpu_custom_call.1} parent=1 // pred_check
      _
    $region11: #{tpu_custom_call.1} parent=1 // pred_check_branch
      %28 = sbr.rel (0) target = $region13
    $region12: #{tpu_custom_call.1} parent=1 // pred_region
      _
    $region13: #{tpu_custom_call.1} parent=1 // pred_fallthru
      _
    // Predicated region
    $region14: #{tpu_custom_call.1} parent=1 // pred_check
      _
    $region15: #{tpu_custom_call.1} parent=1 // pred_check_branch
      %30 = sbr.rel (0) target = $region17
    $region16: #{tpu_custom_call.1} parent=1 // pred_region
      _
    $region17: #{tpu_custom_call.1} parent=1 // pred_fallthru
      _
    // Predicated region
    $region18: #{tpu_custom_call.1} parent=1 // pred_check
      _
    $region19: #{tpu_custom_call.1} parent=1 // pred_check_branch
      %32 = sbr.rel (0) target = $region21
    $region20: #{tpu_custom_call.1} parent=1 // pred_region
      _
    $region21: #{tpu_custom_call.1} parent=1 // pred_fallthru
      _
    // Predicated region
    $region22: #{tpu_custom_call.1} parent=1 // pred_check
      _
    $region23: #{tpu_custom_call.1} parent=1 // pred_check_branch
      %34 = sbr.rel (0) target = $region25
    $region24: #{tpu_custom_call.1} parent=1 // pred_region
      _
    $region25: #{tpu_custom_call.1} parent=1 // pred_fallthru
      _
    // Predicated region
    $region26: #{tpu_custom_call.1} parent=1 // pred_check
      _
    $region27: #{tpu_custom_call.1} parent=1 // pred_check_branch
      %36 = sbr.rel (0) target = $region29
    $region28: #{tpu_custom_call.1} parent=1 // pred_region
      %37 = dma.done [#allocation4], 256
    $region29: #{tpu_custom_call.1} parent=1 // pred_fallthru
      _
    %v38 = vld [vmem:[%s0] sm:$0xff]
    %v39 = vld [vmem:[#allocation3] sm:$0xff]
    %v40 = vld [vmem:[#allocation3 + $0x8] sm:$0xff]
    %v41 = vld [vmem:[%s3] sm:$0x1]
    %v43 = vlaneseq
    %v44 = vshrl.u32 %v43, 7
    %v45 = vsub.s32 0, %v44
    %v46 = vrot.slane %v41, %v45
    %vm48 = vcmask 130048
    %v50 = vsel %vm48, %v38, 0
    %52 = vmatprep.subr.mxu0 0.0
    %53 = vmatpush1.msra.mxu0 %v39
    %54 = vmatprep.subr.mxu0 0.0
    %55 = vmatpush1.msra.mxu0 %v40
    %56 = vmatprep.subr.mxu0 0.0
    %57 = vmatpush1.msra.mxu0 0.0
    %58 = vmatprep.subr.mxu0 0.0
    %59 = vmatpush1.msra.mxu0 0.0
    %60 = vmatprep.subr.mxu0 0.0
    %61 = vmatpush1.msra.mxu0 0.0
    %62 = vmatprep.subr.mxu0 0.0
    %63 = vmatpush1.msra.mxu0 0.0
    %64 = vmatprep.subr.mxu0 0.0
    %65 = vmatpush1.msra.mxu0 0.0
    %66 = vmatprep.subr.mxu0 0.0
    %67 = vmatpush1.msra.mxu0 0.0
    %68 = vmatprep.subr.mxu0 0.0
    %69 = vmatpush1.msra.mxu0 0.0
    %70 = vmatprep.subr.mxu0 0.0
    %71 = vmatpush1.msra.mxu0 0.0
    %72 = vmatprep.subr.mxu0 0.0
    %73 = vmatpush1.msra.mxu0 0.0
    %74 = vmatprep.subr.mxu0 0.0
    %75 = vmatpush1.msra.mxu0 0.0
    %76 = vmatprep.subr.mxu0 0.0
    %77 = vmatpush1.msra.mxu0 0.0
    %78 = vmatprep.subr.mxu0 0.0
    %79 = vmatpush1.msra.mxu0 0.0
    %80 = vmatprep.subr.mxu0 0.0
    %81 = vmatpush1.msra.mxu0 0.0
    %82 = vmatprep.subr.mxu0 0.0
    %83 = vmatpush1.msra.mxu0 0.0
    %84 = vmatprep.subr.mxu0 0.0
    %85 = vmatpush1.msra.mxu0 0.0
    %86 = vmatprep.subr.mxu0 0.0
    %87 = vmatpush1.msra.mxu0 0.0
    %88 = vmatprep.subr.mxu0 0.0
    %89 = vmatpush1.msra.mxu0 0.0
    %90 = vmatprep.subr.mxu0 0.0
    %91 = vmatpush1.msra.mxu0 0.0
    %92 = vmatprep.subr.mxu0 0.0
    %93 = vmatpush1.msra.mxu0 0.0
    %94 = vmatprep.subr.mxu0 0.0
    %95 = vmatpush1.msra.mxu0 0.0
    %96 = vmatprep.subr.mxu0 0.0
    %97 = vmatpush1.msra.mxu0 0.0
    %98 = vmatprep.subr.mxu0 0.0
    %99 = vmatpush1.msra.mxu0 0.0
    %100 = vmatprep.subr.mxu0 0.0
    %101 = vmatpush1.msra.mxu0 0.0
    %102 = vmatprep.subr.mxu0 0.0
    %103 = vmatpush1.msra.mxu0 0.0
    %104 = vmatprep.subr.mxu0 0.0
    %105 = vmatpush1.msra.mxu0 0.0
    %106 = vmatprep.subr.mxu0 0.0
    %107 = vmatpush1.msra.mxu0 0.0
    %108 = vmatprep.subr.mxu0 0.0
    %109 = vmatpush1.msra.mxu0 0.0
    %110 = vmatprep.subr.mxu0 0.0
    %111 = vmatpush1.msra.mxu0 0.0
    %112 = vmatprep.subr.mxu0 0.0
    %113 = vmatpush1.msra.mxu0 0.0
    %114 = vmatprep.subr.mxu0 0.0
    %115 = vmatpush1.msra.mxu0 0.0
    %116 = vmatprep.mubr.f32.mxu0 0.0
    %117 = vmatmul.mubr.f32.gmra.mrb[0].mxu0 %v50
    %v118 = vpop.f32.mrb[0].mxu0
    %v119 = vadd.f32 %v46, %v118
    %v120 = vpop.f32.mrb[0].mxu0
    %121 = vdwg.mxu0
    %122 = vst [vmem:[#allocation2] sm:$0xff] %v119
    %v123 = vld [vmem:[%s2] sm:$0xff]
    %v124 = vld [vmem:[%s2 + $0x8] sm:$0xff]
    %v125 = vld [vmem:[%s2 + $0x10] sm:$0xff]
    %v126 = vld [vmem:[%s2 + $0x18] sm:$0xff]
    %v127 = vld [vmem:[#allocation2] sm:$0x1]
    %vm128 = vcmask 261120
    %v130 = vsel %vm128, 0.0, 0
    %132 = vmatprep.subr.mxu0 0.0
    %133 = vmatpush1.msra.mxu0 %v123
    %134 = vmatprep.subr.mxu0 0.0
    %135 = vmatpush1.msra.mxu0 %v124
    %136 = vmatprep.subr.mxu0 0.0
    %137 = vmatpush1.msra.mxu0 %v125
    %138 = vmatprep.subr.mxu0 0.0
    %139 = vmatpush1.msra.mxu0 %v126
    %140 = vmatprep.subr.mxu0 0.0
    %141 = vmatpush1.msra.mxu0 0.0
    %142 = vmatprep.subr.mxu0 0.0
    %143 = vmatpush1.msra.mxu0 0.0
    %144 = vmatprep.subr.mxu0 0.0
    %145 = vmatpush1.msra.mxu0 0.0
    %146 = vmatprep.subr.mxu0 0.0
    %147 = vmatpush1.msra.mxu0 0.0
    %148 = vmatprep.subr.mxu0 0.0
    %149 = vmatpush1.msra.mxu0 0.0
    %150 = vmatprep.subr.mxu0 0.0
    %151 = vmatpush1.msra.mxu0 0.0
    %152 = vmatprep.subr.mxu0 0.0
    %153 = vmatpush1.msra.mxu0 0.0
    %154 = vmatprep.subr.mxu0 0.0
    %155 = vmatpush1.msra.mxu0 0.0
    %156 = vmatprep.subr.mxu0 0.0
    %157 = vmatpush1.msra.mxu0 0.0
    %158 = vmatprep.subr.mxu0 0.0
    %159 = vmatpush1.msra.mxu0 0.0
    %160 = vmatprep.subr.mxu0 0.0
    %161 = vmatpush1.msra.mxu0 0.0
    %162 = vmatprep.subr.mxu0 0.0
    %163 = vmatpush1.msra.mxu0 0.0
    %164 = vmatprep.subr.mxu0 0.0
    %165 = vmatpush1.msra.mxu0 0.0
    %166 = vmatprep.subr.mxu0 0.0
    %167 = vmatpush1.msra.mxu0 0.0
    %168 = vmatprep.subr.mxu0 0.0
    %169 = vmatpush1.msra.mxu0 0.0
    %170 = vmatprep.subr.mxu0 0.0
    %171 = vmatpush1.msra.mxu0 0.0
    %172 = vmatprep.subr.mxu0 0.0
    %173 = vmatpush1.msra.mxu0 0.0
    %174 = vmatprep.subr.mxu0 0.0
    %175 = vmatpush1.msra.mxu0 0.0
    %176 = vmatprep.subr.mxu0 0.0
    %177 = vmatpush1.msra.mxu0 0.0
    %178 = vmatprep.subr.mxu0 0.0
    %179 = vmatpush1.msra.mxu0 0.0
    %180 = vmatprep.subr.mxu0 0.0
    %181 = vmatpush1.msra.mxu0 0.0
    %182 = vmatprep.subr.mxu0 0.0
    %183 = vmatpush1.msra.mxu0 0.0
    %184 = vmatprep.subr.mxu0 0.0
    %185 = vmatpush1.msra.mxu0 0.0
    %186 = vmatprep.subr.mxu0 0.0
    %187 = vmatpush1.msra.mxu0 0.0
    %188 = vmatprep.subr.mxu0 0.0
    %189 = vmatpush1.msra.mxu0 0.0
    %190 = vmatprep.subr.mxu0 0.0
    %191 = vmatpush1.msra.mxu0 0.0
    %192 = vmatprep.subr.mxu0 0.0
    %193 = vmatpush1.msra.mxu0 0.0
    %194 = vmatprep.subr.mxu0 0.0
    %195 = vmatpush1.msra.mxu0 0.0
    %196 = vmatprep.mubr.f32.mxu0 0.0
    %197 = vmatmul.mubr.f32.gmra.mrb[0].mxu0 %v130
    %v198 = vpop.f32.mrb[0].mxu0
    %v199 = vadd.f32 0.0, %v198
    %v200 = vpop.f32.mrb[0].mxu0
    %201 = vdwg.mxu0
    %v202 = vadd.f32 %v127, %v199
    %v203 = vxor.u32 %v202, 2147483648
    %v204 = vmul.f32 %v203, 1.442695
    %v205 = vpow.pop %v204
    %v206 = vadd.f32 %v205, 1.0
    %v207 = vrcp.pop %v206
    %v208 = vmul.f32 1.0, %v207
    %v209 = vtanh.pop %v202
    %v210 = vmul.f32 %v208, 0.0
    %212 = vrot.lane.b32.xlu0 %v209, 64
    %v213 = vpop.permute.xlu0 %212
    %v215 = vmul.f32 %v208, %v213
    %217 = vrot.lane.b32.xlu0 %v215, 32
    %v218 = vpop.permute.xlu0 %217
    %v220 = vadd.f32 %v210, %v218
    %v221 = vtanh.pop %v220
    %223 = vrot.lane.b32.xlu0 %v221, 64
    %v224 = vpop.permute.xlu0 %223
    %v226 = vmul.f32 %v208, %v224
    %v227 = vld [vmem:[#allocation2 + $0x1] sm:$0x1]
    %229 = vrot.lane.b32.xlu0 %v226, 32
    %v230 = vpop.permute.xlu0 %229
    %v231 = vsel %vm128, %v230, 0
    %233 = vmatprep.subr.mxu0 0.0
    %234 = vmatpush1.msra.mxu0 %v123
    %235 = vmatprep.subr.mxu0 0.0
    %236 = vmatpush1.msra.mxu0 %v124
    %237 = vmatprep.subr.mxu0 0.0
    %238 = vmatpush1.msra.mxu0 %v125
    %239 = vmatprep.subr.mxu0 0.0
    %240 = vmatpush1.msra.mxu0 %v126
    %241 = vmatprep.subr.mxu0 0.0
    %242 = vmatpush1.msra.mxu0 0.0
    %243 = vmatprep.subr.mxu0 0.0
    %244 = vmatpush1.msra.mxu0 0.0
    %245 = vmatprep.subr.mxu0 0.0
    %246 = vmatpush1.msra.mxu0 0.0
    %247 = vmatprep.subr.mxu0 0.0
    %248 = vmatpush1.msra.mxu0 0.0
    %249 = vmatprep.subr.mxu0 0.0
    %250 = vmatpush1.msra.mxu0 0.0
    %251 = vmatprep.subr.mxu0 0.0
    %252 = vmatpush1.msra.mxu0 0.0
    %253 = vmatprep.subr.mxu0 0.0
    %254 = vmatpush1.msra.mxu0 0.0
    %255 = vmatprep.subr.mxu0 0.0
    %256 = vmatpush1.msra.mxu0 0.0
    %257 = vmatprep.subr.mxu0 0.0
    %258 = vmatpush1.msra.mxu0 0.0
    %259 = vmatprep.subr.mxu0 0.0
    %260 = vmatpush1.msra.mxu0 0.0
    %261 = vmatprep.subr.mxu0 0.0
    %262 = vmatpush1.msra.mxu0 0.0
    %263 = vmatprep.subr.mxu0 0.0
    %264 = vmatpush1.msra.mxu0 0.0
    %265 = vmatprep.subr.mxu0 0.0
    %266 = vmatpush1.msra.mxu0 0.0
    %267 = vmatprep.subr.mxu0 0.0
    %268 = vmatpush1.msra.mxu0 0.0
    %269 = vmatprep.subr.mxu0 0.0
    %270 = vmatpush1.msra.mxu0 0.0
    %271 = vmatprep.subr.mxu0 0.0
    %272 = vmatpush1.msra.mxu0 0.0
    %273 = vmatprep.subr.mxu0 0.0
    %274 = vmatpush1.msra.mxu0 0.0
    %275 = vmatprep.subr.mxu0 0.0
    %276 = vmatpush1.msra.mxu0 0.0
    %277 = vmatprep.subr.mxu0 0.0
    %278 = vmatpush1.msra.mxu0 0.0
    %279 = vmatprep.subr.mxu0 0.0
    %280 = vmatpush1.msra.mxu0 0.0
    %281 = vmatprep.subr.mxu0 0.0
    %282 = vmatpush1.msra.mxu0 0.0
    %283 = vmatprep.subr.mxu0 0.0
    %284 = vmatpush1.msra.mxu0 0.0
    %285 = vmatprep.subr.mxu0 0.0
    %286 = vmatpush1.msra.mxu0 0.0
    %287 = vmatprep.subr.mxu0 0.0
    %288 = vmatpush1.msra.mxu0 0.0
    %289 = vmatprep.subr.mxu0 0.0
    %290 = vmatpush1.msra.mxu0 0.0
    %291 = vmatprep.subr.mxu0 0.0
    %292 = vmatpush1.msra.mxu0 0.0
    %293 = vmatprep.subr.mxu0 0.0
    %294 = vmatpush1.msra.mxu0 0.0
    %295 = vmatprep.subr.mxu0 0.0
    %296 = vmatpush1.msra.mxu0 0.0
    %297 = vmatprep.mubr.f32.mxu0 0.0
    %298 = vmatmul.mubr.f32.gmra.mrb[0].mxu0 %v231
    %v299 = vpop.f32.mrb[0].mxu0
    %v300 = vadd.f32 0.0, %v299
    %v301 = vpop.f32.mrb[0].mxu0
    %302 = vdwg.mxu0
    %v303 = vadd.f32 %v227, %v300
    %v304 = vxor.u32 %v303, 2147483648
    %v305 = vmul.f32 %v304, 1.442695
    %v306 = vpow.pop %v305
    %v307 = vadd.f32 %v306, 1.0
    %v308 = vrcp.pop %v307
    %v309 = vmul.f32 1.0, %v308
    %v310 = vtanh.pop %v303
    %v311 = vmul.f32 %v309, %v220
    %313 = vrot.lane.b32.xlu0 %v310, 64
    %v314 = vpop.permute.xlu0 %313
    %v316 = vmul.f32 %v309, %v314
    %318 = vrot.lane.b32.xlu0 %v316, 32
    %v319 = vpop.permute.xlu0 %318
    %v321 = vadd.f32 %v311, %v319
    %v322 = vtanh.pop %v321
    %324 = vrot.lane.b32.xlu0 %v322, 64
    %v325 = vpop.permute.xlu0 %324
    %v327 = vmul.f32 %v309, %v325
    %v328 = vld [vmem:[#allocation2 + $0x2] sm:$0x1]
    %330 = vrot.lane.b32.xlu0 %v327, 32
    %v331 = vpop.permute.xlu0 %330
    %v332 = vsel %vm128, %v331, 0
    %334 = vmatprep.subr.mxu0 0.0
    %335 = vmatpush1.msra.mxu0 %v123
    %336 = vmatprep.subr.mxu0 0.0
    %337 = vmatpush1.msra.mxu0 %v124
    %338 = vmatprep.subr.mxu0 0.0
    %339 = vmatpush1.msra.mxu0 %v125
    %340 = vmatprep.subr.mxu0 0.0
    %341 = vmatpush1.msra.mxu0 %v126
    %342 = vmatprep.subr.mxu0 0.0
    %343 = vmatpush1.msra.mxu0 0.0
    %344 = vmatprep.subr.mxu0 0.0
    %345 = vmatpush1.msra.mxu0 0.0
    %346 = vmatprep.subr.mxu0 0.0
    %347 = vmatpush1.msra.mxu0 0.0
    %348 = vmatprep.subr.mxu0 0.0
    %349 = vmatpush1.msra.mxu0 0.0
    %350 = vmatprep.subr.mxu0 0.0
    %351 = vmatpush1.msra.mxu0 0.0
    %352 = vmatprep.subr.mxu0 0.0
    %353 = vmatpush1.msra.mxu0 0.0
    %354 = vmatprep.subr.mxu0 0.0
    %355 = vmatpush1.msra.mxu0 0.0
    %356 = vmatprep.subr.mxu0 0.0
    %357 = vmatpush1.msra.mxu0 0.0
    %358 = vmatprep.subr.mxu0 0.0
    %359 = vmatpush1.msra.mxu0 0.0
    %360 = vmatprep.subr.mxu0 0.0
    %361 = vmatpush1.msra.mxu0 0.0
    %362 = vmatprep.subr.mxu0 0.0
    %363 = vmatpush1.msra.mxu0 0.0
    %364 = vmatprep.subr.mxu0 0.0
    %365 = vmatpush1.msra.mxu0 0.0
    %366 = vmatprep.subr.mxu0 0.0
    %367 = vmatpush1.msra.mxu0 0.0
    %368 = vmatprep.subr.mxu0 0.0
    %369 = vmatpush1.msra.mxu0 0.0
    %370 = vmatprep.subr.mxu0 0.0
    %371 = vmatpush1.msra.mxu0 0.0
    %372 = vmatprep.subr.mxu0 0.0
    %373 = vmatpush1.msra.mxu0 0.0
    %374 = vmatprep.subr.mxu0 0.0
    %375 = vmatpush1.msra.mxu0 0.0
    %376 = vmatprep.subr.mxu0 0.0
    %377 = vmatpush1.msra.mxu0 0.0
    %378 = vmatprep.subr.mxu0 0.0
    %379 = vmatpush1.msra.mxu0 0.0
    %380 = vmatprep.subr.mxu0 0.0
    %381 = vmatpush1.msra.mxu0 0.0
    %382 = vmatprep.subr.mxu0 0.0
    %383 = vmatpush1.msra.mxu0 0.0
    %384 = vmatprep.subr.mxu0 0.0
    %385 = vmatpush1.msra.mxu0 0.0
    %386 = vmatprep.subr.mxu0 0.0
    %387 = vmatpush1.msra.mxu0 0.0
    %388 = vmatprep.subr.mxu0 0.0
    %389 = vmatpush1.msra.mxu0 0.0
    %390 = vmatprep.subr.mxu0 0.0
    %391 = vmatpush1.msra.mxu0 0.0
    %392 = vmatprep.subr.mxu0 0.0
    %393 = vmatpush1.msra.mxu0 0.0
    %394 = vmatprep.subr.mxu0 0.0
    %395 = vmatpush1.msra.mxu0 0.0
    %396 = vmatprep.subr.mxu0 0.0
    %397 = vmatpush1.msra.mxu0 0.0
    %398 = vmatprep.mubr.f32.mxu0 0.0
    %399 = vmatmul.mubr.f32.gmra.mrb[0].mxu0 %v332
    %v400 = vpop.f32.mrb[0].mxu0
    %v401 = vadd.f32 0.0, %v400
    %v402 = vpop.f32.mrb[0].mxu0
    %403 = vdwg.mxu0
    %v404 = vadd.f32 %v328, %v401
    %v405 = vxor.u32 %v404, 2147483648
    %v406 = vmul.f32 %v405, 1.442695
    %v407 = vpow.pop %v406
    %v408 = vadd.f32 %v407, 1.0
    %v409 = vrcp.pop %v408
    %v410 = vmul.f32 1.0, %v409
    %v411 = vtanh.pop %v404
    %v412 = vmul.f32 %v410, %v321
    %414 = vrot.lane.b32.xlu0 %v411, 64
    %v415 = vpop.permute.xlu0 %414
    %v417 = vmul.f32 %v410, %v415
    %419 = vrot.lane.b32.xlu0 %v417, 32
    %v420 = vpop.permute.xlu0 %419
    %v422 = vadd.f32 %v412, %v420
    %v423 = vtanh.pop %v422
    %425 = vrot.lane.b32.xlu0 %v423, 64
    %v426 = vpop.permute.xlu0 %425
    %v428 = vmul.f32 %v410, %v426
    %v429 = vld [vmem:[#allocation2 + $0x3] sm:$0x1]
    %431 = vrot.lane.b32.xlu0 %v428, 32
    %v432 = vpop.permute.xlu0 %431
    %v433 = vsel %vm128, %v432, 0
    %435 = vmatprep.subr.mxu0 0.0
    %436 = vmatpush1.msra.mxu0 %v123
    %437 = vmatprep.subr.mxu0 0.0
    %438 = vmatpush1.msra.mxu0 %v124
    %439 = vmatprep.subr.mxu0 0.0
    %440 = vmatpush1.msra.mxu0 %v125
    %441 = vmatprep.subr.mxu0 0.0
    %442 = vmatpush1.msra.mxu0 %v126
    %443 = vmatprep.subr.mxu0 0.0
    %444 = vmatpush1.msra.mxu0 0.0
    %445 = vmatprep.subr.mxu0 0.0
    %446 = vmatpush1.msra.mxu0 0.0
    %447 = vmatprep.subr.mxu0 0.0
    %448 = vmatpush1.msra.mxu0 0.0
    %449 = vmatprep.subr.mxu0 0.0
    %450 = vmatpush1.msra.mxu0 0.0
    %451 = vmatprep.subr.mxu0 0.0
    %452 = vmatpush1.msra.mxu0 0.0
    %453 = vmatprep.subr.mxu0 0.0
    %454 = vmatpush1.msra.mxu0 0.0
    %455 = vmatprep.subr.mxu0 0.0
    %456 = vmatpush1.msra.mxu0 0.0
    %457 = vmatprep.subr.mxu0 0.0
    %458 = vmatpush1.msra.mxu0 0.0
    %459 = vmatprep.subr.mxu0 0.0
    %460 = vmatpush1.msra.mxu0 0.0
    %461 = vmatprep.subr.mxu0 0.0
    %462 = vmatpush1.msra.mxu0 0.0
    %463 = vmatprep.subr.mxu0 0.0
    %464 = vmatpush1.msra.mxu0 0.0
    %465 = vmatprep.subr.mxu0 0.0
    %466 = vmatpush1.msra.mxu0 0.0
    %467 = vmatprep.subr.mxu0 0.0
    %468 = vmatpush1.msra.mxu0 0.0
    %469 = vmatprep.subr.mxu0 0.0
    %470 = vmatpush1.msra.mxu0 0.0
    %471 = vmatprep.subr.mxu0 0.0
    %472 = vmatpush1.msra.mxu0 0.0
    %473 = vmatprep.subr.mxu0 0.0
    %474 = vmatpush1.msra.mxu0 0.0
    %475 = vmatprep.subr.mxu0 0.0
    %476 = vmatpush1.msra.mxu0 0.0
    %477 = vmatprep.subr.mxu0 0.0
    %478 = vmatpush1.msra.mxu0 0.0
    %479 = vmatprep.subr.mxu0 0.0
    %480 = vmatpush1.msra.mxu0 0.0
    %481 = vmatprep.subr.mxu0 0.0
    %482 = vmatpush1.msra.mxu0 0.0
    %483 = vmatprep.subr.mxu0 0.0
    %484 = vmatpush1.msra.mxu0 0.0
    %485 = vmatprep.subr.mxu0 0.0
    %486 = vmatpush1.msra.mxu0 0.0
    %487 = vmatprep.subr.mxu0 0.0
    %488 = vmatpush1.msra.mxu0 0.0
    %489 = vmatprep.subr.mxu0 0.0
    %490 = vmatpush1.msra.mxu0 0.0
    %491 = vmatprep.subr.mxu0 0.0
    %492 = vmatpush1.msra.mxu0 0.0
    %493 = vmatprep.subr.mxu0 0.0
    %494 = vmatpush1.msra.mxu0 0.0
    %495 = vmatprep.subr.mxu0 0.0
    %496 = vmatpush1.msra.mxu0 0.0
    %497 = vmatprep.subr.mxu0 0.0
    %498 = vmatpush1.msra.mxu0 0.0
    %499 = vmatprep.mubr.f32.mxu0 0.0
    %500 = vmatmul.mubr.f32.gmra.mrb[0].mxu0 %v433
    %v501 = vpop.f32.mrb[0].mxu0
    %v502 = vadd.f32 0.0, %v501
    %v503 = vpop.f32.mrb[0].mxu0
    %504 = vdwg.mxu0
    %v505 = vadd.f32 %v429, %v502
    %v506 = vxor.u32 %v505, 2147483648
    %v507 = vmul.f32 %v506, 1.442695
    %v508 = vpow.pop %v507
    %v509 = vadd.f32 %v508, 1.0
    %v510 = vrcp.pop %v509
    %v511 = vmul.f32 1.0, %v510
    %v512 = vtanh.pop %v505
    %v513 = vmul.f32 %v511, %v422
    %515 = vrot.lane.b32.xlu0 %v512, 64
    %v516 = vpop.permute.xlu0 %515
    %v518 = vmul.f32 %v511, %v516
    %520 = vrot.lane.b32.xlu0 %v518, 32
    %v521 = vpop.permute.xlu0 %520
    %v523 = vadd.f32 %v513, %v521
    %v524 = vtanh.pop %v523
    %526 = vrot.lane.b32.xlu0 %v524, 64
    %v527 = vpop.permute.xlu0 %526
    %v529 = vmul.f32 %v511, %v527
    %v530 = vld [vmem:[#allocation2 + $0x4] sm:$0x1]
    %532 = vrot.lane.b32.xlu0 %v529, 32
    %v533 = vpop.permute.xlu0 %532
    %v534 = vsel %vm128, %v533, 0
    %536 = vmatprep.subr.mxu0 0.0
    %537 = vmatpush1.msra.mxu0 %v123
    %538 = vmatprep.subr.mxu0 0.0
    %539 = vmatpush1.msra.mxu0 %v124
    %540 = vmatprep.subr.mxu0 0.0
    %541 = vmatpush1.msra.mxu0 %v125
    %542 = vmatprep.subr.mxu0 0.0
    %543 = vmatpush1.msra.mxu0 %v126
    %544 = vmatprep.subr.mxu0 0.0
    %545 = vmatpush1.msra.mxu0 0.0
    %546 = vmatprep.subr.mxu0 0.0
    %547 = vmatpush1.msra.mxu0 0.0
    %548 = vmatprep.subr.mxu0 0.0
    %549 = vmatpush1.msra.mxu0 0.0
    %550 = vmatprep.subr.mxu0 0.0
    %551 = vmatpush1.msra.mxu0 0.0
    %552 = vmatprep.subr.mxu0 0.0
    %553 = vmatpush1.msra.mxu0 0.0
    %554 = vmatprep.subr.mxu0 0.0
    %555 = vmatpush1.msra.mxu0 0.0
    %556 = vmatprep.subr.mxu0 0.0
    %557 = vmatpush1.msra.mxu0 0.0
    %558 = vmatprep.subr.mxu0 0.0
    %559 = vmatpush1.msra.mxu0 0.0
    %560 = vmatprep.subr.mxu0 0.0
    %561 = vmatpush1.msra.mxu0 0.0
    %562 = vmatprep.subr.mxu0 0.0
    %563 = vmatpush1.msra.mxu0 0.0
    %564 = vmatprep.subr.mxu0 0.0
    %565 = vmatpush1.msra.mxu0 0.0
    %566 = vmatprep.subr.mxu0 0.0
    %567 = vmatpush1.msra.mxu0 0.0
    %568 = vmatprep.subr.mxu0 0.0
    %569 = vmatpush1.msra.mxu0 0.0
    %570 = vmatprep.subr.mxu0 0.0
    %571 = vmatpush1.msra.mxu0 0.0
    %572 = vmatprep.subr.mxu0 0.0
    %573 = vmatpush1.msra.mxu0 0.0
    %574 = vmatprep.subr.mxu0 0.0
    %575 = vmatpush1.msra.mxu0 0.0
    %576 = vmatprep.subr.mxu0 0.0
    %577 = vmatpush1.msra.mxu0 0.0
    %578 = vmatprep.subr.mxu0 0.0
    %579 = vmatpush1.msra.mxu0 0.0
    %580 = vmatprep.subr.mxu0 0.0
    %581 = vmatpush1.msra.mxu0 0.0
    %582 = vmatprep.subr.mxu0 0.0
    %583 = vmatpush1.msra.mxu0 0.0
    %584 = vmatprep.subr.mxu0 0.0
    %585 = vmatpush1.msra.mxu0 0.0
    %586 = vmatprep.subr.mxu0 0.0
    %587 = vmatpush1.msra.mxu0 0.0
    %588 = vmatprep.subr.mxu0 0.0
    %589 = vmatpush1.msra.mxu0 0.0
    %590 = vmatprep.subr.mxu0 0.0
    %591 = vmatpush1.msra.mxu0 0.0
    %592 = vmatprep.subr.mxu0 0.0
    %593 = vmatpush1.msra.mxu0 0.0
    %594 = vmatprep.subr.mxu0 0.0
    %595 = vmatpush1.msra.mxu0 0.0
    %596 = vmatprep.subr.mxu0 0.0
    %597 = vmatpush1.msra.mxu0 0.0
    %598 = vmatprep.subr.mxu0 0.0
    %599 = vmatpush1.msra.mxu0 0.0
    %600 = vmatprep.mubr.f32.mxu0 0.0
    %601 = vmatmul.mubr.f32.gmra.mrb[0].mxu0 %v534
    %v602 = vpop.f32.mrb[0].mxu0
    %v603 = vadd.f32 0.0, %v602
    %v604 = vpop.f32.mrb[0].mxu0
    %605 = vdwg.mxu0
    %v606 = vadd.f32 %v530, %v603
    %v607 = vxor.u32 %v606, 2147483648
    %v608 = vmul.f32 %v607, 1.442695
    %v609 = vpow.pop %v608
    %v610 = vadd.f32 %v609, 1.0
    %v611 = vrcp.pop %v610
    %v612 = vmul.f32 1.0, %v611
    %v613 = vtanh.pop %v606
    %v614 = vmul.f32 %v612, %v523
    %616 = vrot.lane.b32.xlu0 %v613, 64
    %v617 = vpop.permute.xlu0 %616
    %v619 = vmul.f32 %v612, %v617
    %621 = vrot.lane.b32.xlu0 %v619, 32
    %v622 = vpop.permute.xlu0 %621
    %v624 = vadd.f32 %v614, %v622
    %v625 = vtanh.pop %v624
    %627 = vrot.lane.b32.xlu0 %v625, 64
    %v628 = vpop.permute.xlu0 %627
    %v630 = vmul.f32 %v612, %v628
    %v631 = vld [vmem:[#allocation2 + $0x5] sm:$0x1]
    %633 = vrot.lane.b32.xlu0 %v630, 32
    %v634 = vpop.permute.xlu0 %633
    %v635 = vsel %vm128, %v634, 0
    %637 = vmatprep.subr.mxu0 0.0
    %638 = vmatpush1.msra.mxu0 %v123
    %639 = vmatprep.subr.mxu0 0.0
    %640 = vmatpush1.msra.mxu0 %v124
    %641 = vmatprep.subr.mxu0 0.0
    %642 = vmatpush1.msra.mxu0 %v125
    %643 = vmatprep.subr.mxu0 0.0
    %644 = vmatpush1.msra.mxu0 %v126
    %645 = vmatprep.subr.mxu0 0.0
    %646 = vmatpush1.msra.mxu0 0.0
    %647 = vmatprep.subr.mxu0 0.0
    %648 = vmatpush1.msra.mxu0 0.0
    %649 = vmatprep.subr.mxu0 0.0
    %650 = vmatpush1.msra.mxu0 0.0
    %651 = vmatprep.subr.mxu0 0.0
    %652 = vmatpush1.msra.mxu0 0.0
    %653 = vmatprep.subr.mxu0 0.0
    %654 = vmatpush1.msra.mxu0 0.0
    %655 = vmatprep.subr.mxu0 0.0
    %656 = vmatpush1.msra.mxu0 0.0
    %657 = vmatprep.subr.mxu0 0.0
    %658 = vmatpush1.msra.mxu0 0.0
    %659 = vmatprep.subr.mxu0 0.0
    %660 = vmatpush1.msra.mxu0 0.0
    %661 = vmatprep.subr.mxu0 0.0
    %662 = vmatpush1.msra.mxu0 0.0
    %663 = vmatprep.subr.mxu0 0.0
    %664 = vmatpush1.msra.mxu0 0.0
    %665 = vmatprep.subr.mxu0 0.0
    %666 = vmatpush1.msra.mxu0 0.0
    %667 = vmatprep.subr.mxu0 0.0
    %668 = vmatpush1.msra.mxu0 0.0
    %669 = vmatprep.subr.mxu0 0.0
    %670 = vmatpush1.msra.mxu0 0.0
    %671 = vmatprep.subr.mxu0 0.0
    %672 = vmatpush1.msra.mxu0 0.0
    %673 = vmatprep.subr.mxu0 0.0
    %674 = vmatpush1.msra.mxu0 0.0
    %675 = vmatprep.subr.mxu0 0.0
    %676 = vmatpush1.msra.mxu0 0.0
    %677 = vmatprep.subr.mxu0 0.0
    %678 = vmatpush1.msra.mxu0 0.0
    %679 = vmatprep.subr.mxu0 0.0
    %680 = vmatpush1.msra.mxu0 0.0
    %681 = vmatprep.subr.mxu0 0.0
    %682 = vmatpush1.msra.mxu0 0.0
    %683 = vmatprep.subr.mxu0 0.0
    %684 = vmatpush1.msra.mxu0 0.0
    %685 = vmatprep.subr.mxu0 0.0
    %686 = vmatpush1.msra.mxu0 0.0
    %687 = vmatprep.subr.mxu0 0.0
    %688 = vmatpush1.msra.mxu0 0.0
    %689 = vmatprep.subr.mxu0 0.0
    %690 = vmatpush1.msra.mxu0 0.0
    %691 = vmatprep.subr.mxu0 0.0
    %692 = vmatpush1.msra.mxu0 0.0
    %693 = vmatprep.subr.mxu0 0.0
    %694 = vmatpush1.msra.mxu0 0.0
    %695 = vmatprep.subr.mxu0 0.0
    %696 = vmatpush1.msra.mxu0 0.0
    %697 = vmatprep.subr.mxu0 0.0
    %698 = vmatpush1.msra.mxu0 0.0
    %699 = vmatprep.subr.mxu0 0.0
    %700 = vmatpush1.msra.mxu0 0.0
    %701 = vmatprep.mubr.f32.mxu0 0.0
    %702 = vmatmul.mubr.f32.gmra.mrb[0].mxu0 %v635
    %v703 = vpop.f32.mrb[0].mxu0
    %v704 = vadd.f32 0.0, %v703
    %v705 = vpop.f32.mrb[0].mxu0
    %706 = vdwg.mxu0
    %v707 = vadd.f32 %v631, %v704
    %v708 = vxor.u32 %v707, 2147483648
    %v709 = vmul.f32 %v708, 1.442695
    %v710 = vpow.pop %v709
    %v711 = vadd.f32 %v710, 1.0
    %v712 = vrcp.pop %v711
    %v713 = vmul.f32 1.0, %v712
    %v714 = vtanh.pop %v707
    %v715 = vmul.f32 %v713, %v624
    %717 = vrot.lane.b32.xlu0 %v714, 64
    %v718 = vpop.permute.xlu0 %717
    %v720 = vmul.f32 %v713, %v718
    %722 = vrot.lane.b32.xlu0 %v720, 32
    %v723 = vpop.permute.xlu0 %722
    %v725 = vadd.f32 %v715, %v723
    %v726 = vtanh.pop %v725
    %728 = vrot.lane.b32.xlu0 %v726, 64
    %v729 = vpop.permute.xlu0 %728
    %v731 = vmul.f32 %v713, %v729
    %v732 = vld [vmem:[#allocation2 + $0x6] sm:$0x1]
    %734 = vrot.lane.b32.xlu0 %v731, 32
    %v735 = vpop.permute.xlu0 %734
    %v736 = vsel %vm128, %v735, 0
    %738 = vmatprep.subr.mxu0 0.0
    %739 = vmatpush1.msra.mxu0 %v123
    %740 = vmatprep.subr.mxu0 0.0
    %741 = vmatpush1.msra.mxu0 %v124
    %742 = vmatprep.subr.mxu0 0.0
    %743 = vmatpush1.msra.mxu0 %v125
    %744 = vmatprep.subr.mxu0 0.0
    %745 = vmatpush1.msra.mxu0 %v126
    %746 = vmatprep.subr.mxu0 0.0
    %747 = vmatpush1.msra.mxu0 0.0
    %748 = vmatprep.subr.mxu0 0.0
    %749 = vmatpush1.msra.mxu0 0.0
    %750 = vmatprep.subr.mxu0 0.0
    %751 = vmatpush1.msra.mxu0 0.0
    %752 = vmatprep.subr.mxu0 0.0
    %753 = vmatpush1.msra.mxu0 0.0
    %754 = vmatprep.subr.mxu0 0.0
    %755 = vmatpush1.msra.mxu0 0.0
    %756 = vmatprep.subr.mxu0 0.0
    %757 = vmatpush1.msra.mxu0 0.0
    %758 = vmatprep.subr.mxu0 0.0
    %759 = vmatpush1.msra.mxu0 0.0
    %760 = vmatprep.subr.mxu0 0.0
    %761 = vmatpush1.msra.mxu0 0.0
    %762 = vmatprep.subr.mxu0 0.0
    %763 = vmatpush1.msra.mxu0 0.0
    %764 = vmatprep.subr.mxu0 0.0
    %765 = vmatpush1.msra.mxu0 0.0
    %766 = vmatprep.subr.mxu0 0.0
    %767 = vmatpush1.msra.mxu0 0.0
    %768 = vmatprep.subr.mxu0 0.0
    %769 = vmatpush1.msra.mxu0 0.0
    %770 = vmatprep.subr.mxu0 0.0
    %771 = vmatpush1.msra.mxu0 0.0
    %772 = vmatprep.subr.mxu0 0.0
    %773 = vmatpush1.msra.mxu0 0.0
    %774 = vmatprep.subr.mxu0 0.0
    %775 = vmatpush1.msra.mxu0 0.0
    %776 = vmatprep.subr.mxu0 0.0
    %777 = vmatpush1.msra.mxu0 0.0
    %778 = vmatprep.subr.mxu0 0.0
    %779 = vmatpush1.msra.mxu0 0.0
    %780 = vmatprep.subr.mxu0 0.0
    %781 = vmatpush1.msra.mxu0 0.0
    %782 = vmatprep.subr.mxu0 0.0
    %783 = vmatpush1.msra.mxu0 0.0
    %784 = vmatprep.subr.mxu0 0.0
    %785 = vmatpush1.msra.mxu0 0.0
    %786 = vmatprep.subr.mxu0 0.0
    %787 = vmatpush1.msra.mxu0 0.0
    %788 = vmatprep.subr.mxu0 0.0
    %789 = vmatpush1.msra.mxu0 0.0
    %790 = vmatprep.subr.mxu0 0.0
    %791 = vmatpush1.msra.mxu0 0.0
    %792 = vmatprep.subr.mxu0 0.0
    %793 = vmatpush1.msra.mxu0 0.0
    %794 = vmatprep.subr.mxu0 0.0
    %795 = vmatpush1.msra.mxu0 0.0
    %796 = vmatprep.subr.mxu0 0.0
    %797 = vmatpush1.msra.mxu0 0.0
    %798 = vmatprep.subr.mxu0 0.0
    %799 = vmatpush1.msra.mxu0 0.0
    %800 = vmatprep.subr.mxu0 0.0
    %801 = vmatpush1.msra.mxu0 0.0
    %802 = vmatprep.mubr.f32.mxu0 0.0
    %803 = vmatmul.mubr.f32.gmra.mrb[0].mxu0 %v736
    %v804 = vpop.f32.mrb[0].mxu0
    %v805 = vadd.f32 0.0, %v804
    %v806 = vpop.f32.mrb[0].mxu0
    %807 = vdwg.mxu0
    %v808 = vadd.f32 %v732, %v805
    %v809 = vxor.u32 %v808, 2147483648
    %v810 = vmul.f32 %v809, 1.442695
    %v811 = vpow.pop %v810
    %v812 = vadd.f32 %v811, 1.0
    %v813 = vrcp.pop %v812
    %v814 = vmul.f32 1.0, %v813
    %v815 = vtanh.pop %v808
    %v816 = vmul.f32 %v814, %v725
    %818 = vrot.lane.b32.xlu0 %v815, 64
    %v819 = vpop.permute.xlu0 %818
    %v821 = vmul.f32 %v814, %v819
    %823 = vrot.lane.b32.xlu0 %v821, 32
    %v824 = vpop.permute.xlu0 %823
    %v826 = vadd.f32 %v816, %v824
    %v827 = vtanh.pop %v826
    %829 = vrot.lane.b32.xlu0 %v827, 64
    %v830 = vpop.permute.xlu0 %829
    %v832 = vmul.f32 %v814, %v830
    %v833 = vld [vmem:[#allocation2 + $0x7] sm:$0x1]
    %835 = vrot.lane.b32.xlu0 %v832, 32
    %v836 = vpop.permute.xlu0 %835
    %v837 = vsel %vm128, %v836, 0
    %839 = vmatprep.subr.mxu0 0.0
    %840 = vmatpush1.msra.mxu0 %v123
    %841 = vmatprep.subr.mxu0 0.0
    %842 = vmatpush1.msra.mxu0 %v124
    %843 = vmatprep.subr.mxu0 0.0
    %844 = vmatpush1.msra.mxu0 %v125
    %845 = vmatprep.subr.mxu0 0.0
    %846 = vmatpush1.msra.mxu0 %v126
    %847 = vmatprep.subr.mxu0 0.0
    %848 = vmatpush1.msra.mxu0 0.0
    %849 = vmatprep.subr.mxu0 0.0
    %850 = vmatpush1.msra.mxu0 0.0
    %851 = vmatprep.subr.mxu0 0.0
    %852 = vmatpush1.msra.mxu0 0.0
    %853 = vmatprep.subr.mxu0 0.0
    %854 = vmatpush1.msra.mxu0 0.0
    %855 = vmatprep.subr.mxu0 0.0
    %856 = vmatpush1.msra.mxu0 0.0
    %857 = vmatprep.subr.mxu0 0.0
    %858 = vmatpush1.msra.mxu0 0.0
    %859 = vmatprep.subr.mxu0 0.0
    %860 = vmatpush1.msra.mxu0 0.0
    %861 = vmatprep.subr.mxu0 0.0
    %862 = vmatpush1.msra.mxu0 0.0
    %863 = vmatprep.subr.mxu0 0.0
    %864 = vmatpush1.msra.mxu0 0.0
    %865 = vmatprep.subr.mxu0 0.0
    %866 = vmatpush1.msra.mxu0 0.0
    %867 = vmatprep.subr.mxu0 0.0
    %868 = vmatpush1.msra.mxu0 0.0
    %869 = vmatprep.subr.mxu0 0.0
    %870 = vmatpush1.msra.mxu0 0.0
    %871 = vmatprep.subr.mxu0 0.0
    %872 = vmatpush1.msra.mxu0 0.0
    %873 = vmatprep.subr.mxu0 0.0
    %874 = vmatpush1.msra.mxu0 0.0
    %875 = vmatprep.subr.mxu0 0.0
    %876 = vmatpush1.msra.mxu0 0.0
    %877 = vmatprep.subr.mxu0 0.0
    %878 = vmatpush1.msra.mxu0 0.0
    %879 = vmatprep.subr.mxu0 0.0
    %880 = vmatpush1.msra.mxu0 0.0
    %881 = vmatprep.subr.mxu0 0.0
    %882 = vmatpush1.msra.mxu0 0.0
    %883 = vmatprep.subr.mxu0 0.0
    %884 = vmatpush1.msra.mxu0 0.0
    %885 = vmatprep.subr.mxu0 0.0
    %886 = vmatpush1.msra.mxu0 0.0
    %887 = vmatprep.subr.mxu0 0.0
    %888 = vmatpush1.msra.mxu0 0.0
    %889 = vmatprep.subr.mxu0 0.0
    %890 = vmatpush1.msra.mxu0 0.0
    %891 = vmatprep.subr.mxu0 0.0
    %892 = vmatpush1.msra.mxu0 0.0
    %893 = vmatprep.subr.mxu0 0.0
    %894 = vmatpush1.msra.mxu0 0.0
    %895 = vmatprep.subr.mxu0 0.0
    %896 = vmatpush1.msra.mxu0 0.0
    %897 = vmatprep.subr.mxu0 0.0
    %898 = vmatpush1.msra.mxu0 0.0
    %899 = vmatprep.subr.mxu0 0.0
    %900 = vmatpush1.msra.mxu0 0.0
    %901 = vmatprep.subr.mxu0 0.0
    %902 = vmatpush1.msra.mxu0 0.0
    %903 = vmatprep.mubr.f32.mxu0 0.0
    %904 = vmatmul.mubr.f32.gmra.mrb[0].mxu0 %v837
    %v905 = vpop.f32.mrb[0].mxu0
    %v906 = vadd.f32 0.0, %v905
    %v907 = vpop.f32.mrb[0].mxu0
    %908 = vdwg.mxu0
    %v909 = vadd.f32 %v833, %v906
    %v910 = vxor.u32 %v909, 2147483648
    %v911 = vmul.f32 %v910, 1.442695
    %v912 = vpow.pop %v911
    %v913 = vadd.f32 %v912, 1.0
    %v914 = vrcp.pop %v913
    %v915 = vmul.f32 1.0, %v914
    %v916 = vtanh.pop %v909
    %v917 = vmul.f32 %v915, %v826
    %919 = vrot.lane.b32.xlu0 %v916, 64
    %v920 = vpop.permute.xlu0 %919
    %v922 = vmul.f32 %v915, %v920
    %924 = vrot.lane.b32.xlu0 %v922, 32
    %v925 = vpop.permute.xlu0 %924
    %v927 = vadd.f32 %v917, %v925
    %v928 = vtanh.pop %v927
    %930 = vrot.lane.b32.xlu0 %v928, 64
    %v931 = vpop.permute.xlu0 %930
    %v933 = vmul.f32 %v915, %v931
    %v934 = vld [vmem:[%s4] sm:$0xff]
    %v935 = vld [vmem:[%s4 + $0x8] sm:$0xff]
    %v936 = vld [vmem:[%s4 + $0x10] sm:$0xff]
    %v937 = vld [vmem:[%s4 + $0x18] sm:$0xff]
    %v938 = vld [vmem:[%s5] sm:$0x1]
    %940 = vrot.lane.b32.xlu0 %v933, 32
    %v941 = vpop.permute.xlu0 %940
    %v942 = vsel %vm128, %v941, 0
    %944 = vmatprep.subr.mxu0 0.0
    %945 = vmatpush1.msra.mxu0 %v934
    %946 = vmatprep.subr.mxu0 0.0
    %947 = vmatpush1.msra.mxu0 %v935
    %948 = vmatprep.subr.mxu0 0.0
    %949 = vmatpush1.msra.mxu0 %v936
    %950 = vmatprep.subr.mxu0 0.0
    %951 = vmatpush1.msra.mxu0 %v937
    %952 = vmatprep.subr.mxu0 0.0
    %953 = vmatpush1.msra.mxu0 0.0
    %954 = vmatprep.subr.mxu0 0.0
    %955 = vmatpush1.msra.mxu0 0.0
    %956 = vmatprep.subr.mxu0 0.0
    %957 = vmatpush1.msra.mxu0 0.0
    %958 = vmatprep.subr.mxu0 0.0
    %959 = vmatpush1.msra.mxu0 0.0
    %960 = vmatprep.subr.mxu0 0.0
    %961 = vmatpush1.msra.mxu0 0.0
    %962 = vmatprep.subr.mxu0 0.0
    %963 = vmatpush1.msra.mxu0 0.0
    %964 = vmatprep.subr.mxu0 0.0
    %965 = vmatpush1.msra.mxu0 0.0
    %966 = vmatprep.subr.mxu0 0.0
    %967 = vmatpush1.msra.mxu0 0.0
    %968 = vmatprep.subr.mxu0 0.0
    %969 = vmatpush1.msra.mxu0 0.0
    %970 = vmatprep.subr.mxu0 0.0
    %971 = vmatpush1.msra.mxu0 0.0
    %972 = vmatprep.subr.mxu0 0.0
    %973 = vmatpush1.msra.mxu0 0.0
    %974 = vmatprep.subr.mxu0 0.0
    %975 = vmatpush1.msra.mxu0 0.0
    %976 = vmatprep.subr.mxu0 0.0
    %977 = vmatpush1.msra.mxu0 0.0
    %978 = vmatprep.subr.mxu0 0.0
    %979 = vmatpush1.msra.mxu0 0.0
    %980 = vmatprep.subr.mxu0 0.0
    %981 = vmatpush1.msra.mxu0 0.0
    %982 = vmatprep.subr.mxu0 0.0
    %983 = vmatpush1.msra.mxu0 0.0
    %984 = vmatprep.subr.mxu0 0.0
    %985 = vmatpush1.msra.mxu0 0.0
    %986 = vmatprep.subr.mxu0 0.0
    %987 = vmatpush1.msra.mxu0 0.0
    %988 = vmatprep.subr.mxu0 0.0
    %989 = vmatpush1.msra.mxu0 0.0
    %990 = vmatprep.subr.mxu0 0.0
    %991 = vmatpush1.msra.mxu0 0.0
    %992 = vmatprep.subr.mxu0 0.0
    %993 = vmatpush1.msra.mxu0 0.0
    %994 = vmatprep.subr.mxu0 0.0
    %995 = vmatpush1.msra.mxu0 0.0
    %996 = vmatprep.subr.mxu0 0.0
    %997 = vmatpush1.msra.mxu0 0.0
    %998 = vmatprep.subr.mxu0 0.0
    %999 = vmatpush1.msra.mxu0 0.0
    %1000 = vmatprep.subr.mxu0 0.0
    %1001 = vmatpush1.msra.mxu0 0.0
    %1002 = vmatprep.subr.mxu0 0.0
    %1003 = vmatpush1.msra.mxu0 0.0
    %1004 = vmatprep.subr.mxu0 0.0
    %1005 = vmatpush1.msra.mxu0 0.0
    %1006 = vmatprep.subr.mxu0 0.0
    %1007 = vmatpush1.msra.mxu0 0.0
    %1008 = vmatprep.mubr.f32.mxu0 0.0
    %1009 = vmatmul.mubr.f32.gmra.mrb[0].mxu0 %v942
    %v1010 = vpop.f32.mrb[0].mxu0
    %v1011 = vadd.f32 %v938, %v1010
    %v1012 = vpop.f32.mrb[0].mxu0
    %1013 = vdwg.mxu0
    %vm1014 = vcmask 57344
    %1015 = vst.msk [vmem:[#allocation6] sm:$0x1] %vm1014, %v1011
    // Predicated region
    $region30: #{tpu_custom_call.1} parent=1 // pred_check
      _
    $region31: #{tpu_custom_call.1} parent=1 // pred_check_branch
      %1017 = sbr.rel (0) target = $region33
    $region32: #{tpu_custom_call.1} parent=1 // pred_region
      %s1019 = ssub.s32 16, 16
      %1020 = vsyncadd [#allocation5], %s1019
      %s1022 = sshll.u32 [#allocation6], 4
      %s1023 = int_to_ptr.vmem [resolvable:$true] %s1022
      %1025 = dma.vmem_to_hbm [thread:$0]  %s1023, 16, %s6, [#allocation5]
    $region33: #{tpu_custom_call.1} parent=1 // pred_fallthru
      _
    // Predicated region
    $region34: #{tpu_custom_call.1} parent=1 // pred_check
      _
    $region35: #{tpu_custom_call.1} parent=1 // pred_check_branch
      %1027 = sbr.rel (0) target = $region37
    $region36: #{tpu_custom_call.1} parent=1 // pred_region
      %1028 = dma.done [#allocation5], 16
    $region37: #{tpu_custom_call.1} parent=1 // pred_fallthru
      _
    %1029 = vsyncpa [#allocation4], 1
    %1030 = vsyncpa [#allocation5], 1

</llo_original>
